<compile_context>
chip_gen: v7x
topology: tpu7x:2x2x1
jax: 0.10.0
libtpu: 0.0.40
codegen_flags: <defaults>
</compile_context>

<pallas_src>
import jax
import jax.numpy as jnp
import numpy as np
from jax.experimental import pallas as pl
from jax.experimental.pallas import tpu as pltpu


def _pos_add_kernel(x_ref, pe_ref, o_ref):
    """Elementwise: out = where(x != 0, x + pe, x).  Blocks: x/o (br, bc), pe (1, bc)."""
    x = x_ref[...]
    pe = pe_ref[...]                     # same dtype as x; broadcasts over rows
    o_ref[...] = jnp.where(x != 0, x + pe, x)


def _positional_table(seq_length, token_length, freq):
    """Host-side (trace-time) port of get_position_encoding -> (S, T) float32."""
    t = np.arange(token_length)
    exponent = 2.0 * (t // 2).astype(np.float64) / float(token_length)
    # Reproduces torch.div(1, freq**exp, rounding_mode='trunc'): d = [1, 1, 0, 0, ...]
    d = np.trunc(1.0 / np.power(float(freq), exponent)).astype(np.float32)   # (T,)
    s = np.arange(seq_length, dtype=np.float32)[:, None]                     # (S, 1)
    ang = s * d[None, :]                                                     # (S, T)
    even_s = (np.arange(seq_length)[:, None] % 2) == 0
    return np.where(even_s, np.sin(ang), np.cos(ang)).astype(np.float32)     # (S, T)


def _choose_tiles(num_rows, num_cols, itemsize, target_bytes=4 << 20):
    """Pick (row_block, col_block): each a native-tile multiple or the full dim."""
    # Native sublane tile depends on packing: f32 -> 8, bf16 -> 16, int8/fp8 -> 32.
    sub = {4: 8, 2: 16, 1: 32}.get(itemsize, 8)
    row_bytes = num_cols * itemsize

    if row_bytes > target_bytes:
        # Very wide rows: small row block, lane axis tiled in 128-multiples.
        br = num_rows if num_rows <= sub else sub
        bc = (target_bytes // max(1, br * itemsize)) // 128 * 128
        bc = min(num_cols, max(128, bc))
        return br, bc

    # Whole flattened rows fit in one block: full-width columns, tile over rows.
    bc = num_cols
    br = min(num_rows, max(1, target_bytes // max(1, row_bytes)))
    if num_rows >= 2 * sub:
        # Keep >= 2 legal row blocks so both v7x TensorCores get a share.
        br = min(br, -(-num_rows // 2))
    if br != num_rows:
        br = max(sub, (br // sub) * sub)
        if br >= num_rows:
            br = num_rows
    if br == num_rows and bc == num_cols and num_cols >= 256:
        # Grid would collapse to (1, 1): split the lane axis instead so the
        # two TensorCores on a v7x chip can both stream.
        bc = max(128, ((num_cols // 2) // 128) * 128)
    return br, bc


def position_encoder(x, seq_length, token_length, freq=100000.0,
                     *, min_bytes_for_pallas=1 << 20):
    """Pallas implementation of PositionEncoder(pos_type='positional').forward(x)."""
    B, S, T = x.shape
    assert S == seq_length and T == token_length

    # Batch-/input-invariant table: computed once host-side, cast to compute dtype.
    pe_st = jnp.asarray(_positional_table(S, T, freq), dtype=x.dtype)        # (S, T)

    itemsize = jnp.dtype(x.dtype).itemsize
    if B * S * T * itemsize < min_bytes_for_pallas:
        # Micro inputs: launch + pipeline fixed overhead dominates -> plain XLA.
        return jnp.where(x != 0, x + pe_st[None], x)

    C = S * T
    x2 = x.reshape(B, C)                  # lane-dense view -> full-width vst stores
    pe = pe_st.reshape(1, C)

    br, bc = _choose_tiles(B, C, itemsize)
    # Column axis OUTER, row axis inner: pe's block index only changes with the
    # outer index, so each pe column block is DMA'd exactly once (VMEM-resident
    # across the whole inner row sweep) instead of once per grid step.
    grid = (pl.cdiv(C, bc), pl.cdiv(B, br))

    out2 = pl.pallas_call(
        _pos_add_kernel,
        out_shape=jax.ShapeDtypeStruct((B, C), x.dtype),
        grid=grid,
        in_specs=[
            pl.BlockSpec((br, bc), lambda j, i: (i, j)),   # x: streamed
            pl.BlockSpec((1, bc), lambda j, i: (0, j)),    # pe: fetched once / col block
        ],
        out_specs=pl.BlockSpec((br, bc), lambda j, i: (i, j)),
        compiler_params=pltpu.CompilerParams(
            dimension_semantics=("parallel", "parallel"),
            # double-buffered (in + out) ~4 MiB tiles + pe << 48 MiB: fits v7x's
            # 64 MiB physical VMEM and the 128 MiB on v5e/v6e.
            vmem_limit_bytes=48 * 1024 * 1024,
        ),
        # NOTE: callers that no longer need x could add input_output_aliases={0: 0}
        # to drop the second B*C HBM allocation; left off so x stays valid here.
    )(x2, pe)

    return out2.reshape(B, S, T)


def _reference_numpy(x, seq_length, token_length, freq=100000.0):
    """Pure-numpy port of the PyTorch reference (verification only, float32)."""
    t = np.arange(token_length)
    exponent = 2.0 * (t // 2).astype(np.float32) / np.float32(token_length)
    d = np.trunc(1.0 / np.power(np.float32(freq), exponent)).astype(np.float32)
    dim_t = np.arange(seq_length, dtype=np.float32)[None, :] * d[:, None]    # (T, S)
    pe = np.zeros((token_length, seq_length), dtype=np.float32)
    pe[:, 0::2] = np.sin(dim_t[:, 0::2])
    pe[:, 1::2] = np.cos(dim_t[:, 1::2])
    pe = pe.T                                                                # (S, T)
    pe = np.broadcast_to(pe[None], x.shape)
    mask = (x != 0).astype(np.float32)
    return pe * mask + x


if __name__ == "__main__":
    key = jax.random.PRNGKey(0)
    k1, k2 = jax.random.split(key)

    # Demo shape consistent with the module: batch=2, seq_length=8, token_length=32.
    B, S, T = 2, 8, 32
    x = jax.random.normal(k1, (B, S, T), dtype=jnp.float32)
    x = x.at[:, 2:4, 5:17].set(0.0)            # exercise the x.ne(0) mask path

    out = position_encoder(x, S, T, freq=100000.0, min_bytes_for_pallas=0)  # force Pallas
    out = jax.block_until_ready(out)
    ref = _reference_numpy(np.asarray(x), S, T, freq=100000.0)
    np.testing.assert_allclose(np.asarray(out), ref, rtol=1e-5, atol=1e-5)

    # Second case: bf16 with >1 row block (exercises dtype-aware tiling + grid split).
    B2, S2, T2 = 32, 16, 64
    xb = jax.random.normal(k2, (B2, S2, T2), dtype=jnp.bfloat16)
    xb = xb.at[:, 1:3, 10:40].set(0.0)
    outb = position_encoder(xb, S2, T2, freq=100000.0, min_bytes_for_pallas=0)
    outb = jax.block_until_ready(outb)
    refb = _reference_numpy(np.asarray(xb.astype(jnp.float32)), S2, T2, freq=100000.0)
    np.testing.assert_allclose(np.asarray(outb.astype(jnp.float32)), refb,
                               rtol=5e-2, atol=5e-2)

    print("KERNEL_OK")
</pallas_src>

<mosaic_0001>
module attributes {stable_mosaic.version = 11 : i64} {
  func.func @_pos_add_kernel(%arg0: i32, %arg1: i32, %arg2: memref<2x128xf32, #tpu.memory_space<vmem>>, %arg3: memref<1x128xf32, #tpu.memory_space<vmem>>, %arg4: memref<2x128xf32, #tpu.memory_space<vmem>>) attributes {dimension_semantics = [#tpu.dimension_semantics<parallel>, #tpu.dimension_semantics<parallel>], iteration_bounds = array<i64: 2, 1>, scalar_prefetch = 0 : i64, scratch_operands = 0 : i64, tpu.core_type = #tpu.core_type<tc>, window_params = [{transform_indices = @transform_0, window_bounds = array<i64: 2, 128>}, {transform_indices = @transform_1, window_bounds = array<i64: 1, 128>}, {transform_indices = @transform_2, window_bounds = array<i64: 2, 128>}]} {
    %c0 = arith.constant 0 : index
    %c0_0 = arith.constant 0 : index
    %0 = vector.load %arg2[%c0, %c0_0] : memref<2x128xf32, #tpu.memory_space<vmem>>, vector<2x128xf32>
    %c0_1 = arith.constant 0 : index
    %c0_2 = arith.constant 0 : index
    %1 = vector.load %arg3[%c0_1, %c0_2] : memref<1x128xf32, #tpu.memory_space<vmem>>, vector<1x128xf32>
    %cst = arith.constant 0.000000e+00 : f32
    %2 = vector.broadcast %cst : f32 to vector<2x128xf32>
    %3 = arith.cmpf one, %0, %2 : vector<2x128xf32>
    %4 = vector.broadcast %1 : vector<1x128xf32> to vector<2x128xf32>
    %5 = arith.addf %0, %4 : vector<2x128xf32>
    %6 = arith.select %3, %5, %0 : vector<2x128xi1>, vector<2x128xf32>
    %c0_3 = arith.constant 0 : index
    %c0_4 = arith.constant 0 : index
    %7 = vector.load %arg4[%c0_3, %c0_4] : memref<2x128xf32, #tpu.memory_space<vmem>>, vector<2x128xf32>
    tpu.vector_store %arg4[%c0_3, %c0_4], %6 {strides = array<i32>} : memref<2x128xf32, #tpu.memory_space<vmem>>, vector<2x128xf32>,
    return
  }
  func.func @transform_0(%arg0: i32, %arg1: i32) -> (i32, i32) {
    %c0_i32 = arith.constant 0 : i32
    return %arg1, %arg0 : i32, i32
  }
  func.func @transform_1(%arg0: i32, %arg1: i32) -> (i32, i32) {
    %c0_i32 = arith.constant 0 : i32
    %c0_i32_0 = arith.constant 0 : i32
    return %c0_i32, %arg0 : i32, i32
  }
  func.func @transform_2(%arg0: i32, %arg1: i32) -> (i32, i32) {
    %c0_i32 = arith.constant 0 : i32
    return %arg1, %arg0 : i32, i32
  }
}

</mosaic_0001>

<llo_original>
// kernel: tpu_custom_call.1
$region0: #{tpu_custom_call.1}
  #allocation0 [shape = 'u32[]', space=smem, size = 0x4, offset = 0x4, fixed_abs, tag = 'smem constant byte address 0x4 - core index']
  #allocation1 [shape = 'u32[144,128]{1,0:T(1,128)}', space=vmem, size = 0x12000, scoped, tag = 'internal scratch']
  %s0 = inlined_call_operand.hbm [shape: f32[2,256], index: 0, kind: input, shape index: {}]
  %s1 = inlined_call_operand.vmem [shape: f32[1,256], index: 1, kind: input, shape index: {}]
  %s2 = inlined_call_operand.hbm [shape: f32[2,256], index: 2, kind: output, shape index: {}]
  %s3 = sld [smem:[#allocation0]]
  $region45: #{tpu_custom_call.1} parent=0
    _
  %s5 = ssub.s32 1, %s3
  %s6 = scalar_select 0, %s5, %s3
  $region1: #{tpu_custom_call.1} parent=0
    #allocation2 [shape = 'u8[2048]{0}', space=vmem, size = 0x800, scoped, tag = 'input window, operand 0']
    #allocation3 [shape = 's32[2]{0}', space=sflag, size = 0x8, scoped, tag = 'scoped memory for tpu_custom_call.1']
    #allocation4 [shape = 's32[2]{0}', space=sflag, size = 0x8, scoped, tag = 'scoped memory for tpu_custom_call.1']
    #allocation5 [shape = 'u8[2048]{0}', space=vmem, size = 0x800, scoped, tag = 'output window, operand 0']
    %7 = vsyncpa [#allocation3], 0
    %s8 = scalar_lea.sflag [#allocation3], 1
    %9 = vsyncpa %s8, 0
    %10 = vsyncpa [#allocation4], 0
    %s11 = scalar_lea.sflag [#allocation4], 1
    %12 = vsyncpa %s11, 0
    loop: start=0, step=1, limit=4
    $region2: #{tpu_custom_call.1} parent=1 // loop_pre_header
      _
    $region3: #{tpu_custom_call.1} parent=1 // loop_header
      %s14 = sphi 0, %s18
      %p15 = scmp.ge.s32.totalorder %s14, 4
      %s21 = sphi 0, %s33
      %s22 = sphi 0, %s29
      %s23 = sphi 0, %s21
      %s24 = sphi 0, %s22
      %s25 = sphi 0, %s23
      %s26 = sphi 0, %s24
      %s38 = sphi 0, %s40
      %s41 = sphi 0, %s38
      %s42 = sphi 0, %s41
      %s58 = sphi 0, %s42
      %s64 = sphi 0, %s66
      %s67 = sphi 0, %s64
      %s68 = sphi 0, %s67
      %s84 = sphi 0, %s68
      %s92 = sphi 0, %s94
      %s95 = sphi 0, %s92
      %s96 = sphi 0, %s95
      %s112 = sphi 0, %s96
    $region4: #{tpu_custom_call.1} parent=1 // loop_header_branch
      %17 = sbr.rel (%p15) target = $region8
    $region5: #{tpu_custom_call.1} parent=1 // loop_body
      %s19 = ssub.s32 %s14, 1
      %s20 = ssub.s32 %s14, 2
      %s27 = sadd.s32 1, %s22
      %p28 = scmp.ge.s32.totalorder %s27, 1
      %s29 = scalar_select %p28, 0, %s27
      %s30 = sadd.s32 1, %s21
      %s31 = scalar_select %p28, %s30, %s21
      %p32 = scmp.ge.s32.totalorder %s31, 2
      %s33 = scalar_select %p32, 0, %s31
      %s34 = ssub.s32 %s22, %s29
      %s35 = ssub.s32 %s21, %s33
      %s36 = sor.u32 %s34, %s35
      %p37 = scmp.eq.s32.totalorder %s36, 0
      %s39 = sadd.s32 %s38, 1
      %s40 = scalar_select %p37, %s38, %s39
      %p43 = pneg %p37
      %p44 = scmp.eq.s32.totalorder %s14, 1
      %p45 = por %p43, %p44
      %p46 = scmp.ne.s32.totalorder %s38, %s41
      %p47 = scmp.eq.s32.totalorder %s14, 0
      %p48 = por %p46, %p47
      %p49 = scmp.ne.s32.totalorder %s38, %s41
      %p50 = scmp.eq.s32.totalorder %s19, 1
      %p51 = por %p49, %p50
      %p52 = scmp.ne.s32.totalorder %s41, %s42
      %p53 = scmp.eq.s32.totalorder %s19, 0
      %p54 = por %p52, %p53
      %p55 = scmp.ne.s32.totalorder %s41, %s42
      %p56 = scmp.eq.s32.totalorder %s20, 1
      %p57 = por %p55, %p56
      %p59 = scmp.ne.s32.totalorder %s42, %s58
      %p60 = scmp.eq.s32.totalorder %s20, 0
      %p61 = por %p59, %p60
      %s62 = ssub.s32 %s21, %s33
      %p63 = scmp.eq.s32.totalorder %s62, 0
      %s65 = sadd.s32 %s64, 1
      %s66 = scalar_select %p63, %s64, %s65
      %p69 = pneg %p63
      %p70 = scmp.eq.s32.totalorder %s14, 1
      %p71 = por %p69, %p70
      %p72 = scmp.ne.s32.totalorder %s64, %s67
      %p73 = scmp.eq.s32.totalorder %s14, 0
      %p74 = por %p72, %p73
      %p75 = scmp.ne.s32.totalorder %s64, %s67
      %p76 = scmp.eq.s32.totalorder %s19, 1
      %p77 = por %p75, %p76
      %p78 = scmp.ne.s32.totalorder %s67, %s68
      %p79 = scmp.eq.s32.totalorder %s19, 0
      %p80 = por %p78, %p79
      %p81 = scmp.ne.s32.totalorder %s67, %s68
      %p82 = scmp.eq.s32.totalorder %s20, 1
      %p83 = por %p81, %p82
      %p85 = scmp.ne.s32.totalorder %s68, %s84
      %p86 = scmp.eq.s32.totalorder %s20, 0
      %p87 = por %p85, %p86
      %s88 = ssub.s32 %s22, %s29
      %s89 = ssub.s32 %s21, %s33
      %s90 = sor.u32 %s88, %s89
      %p91 = scmp.eq.s32.totalorder %s90, 0
      %s93 = sadd.s32 %s92, 1
      %s94 = scalar_select %p91, %s92, %s93
      %p97 = pneg %p91
      %p98 = scmp.eq.s32.totalorder %s14, 1
      %p99 = por %p97, %p98
      %p100 = scmp.ne.s32.totalorder %s92, %s95
      %p101 = scmp.eq.s32.totalorder %s14, 0
      %p102 = por %p100, %p101
      %p103 = scmp.ne.s32.totalorder %s92, %s95
      %p104 = scmp.eq.s32.totalorder %s19, 1
      %p105 = por %p103, %p104
      %p106 = scmp.ne.s32.totalorder %s95, %s96
      %p107 = scmp.eq.s32.totalorder %s19, 0
      %p108 = por %p106, %p107
      %p109 = scmp.ne.s32.totalorder %s95, %s96
      %p110 = scmp.eq.s32.totalorder %s20, 1
      %p111 = por %p109, %p110
      %p113 = scmp.ne.s32.totalorder %s96, %s112
      %p114 = scmp.eq.s32.totalorder %s20, 0
      %p115 = por %p113, %p114
      %p116 = scmp.le.s32.totalorder 1, %s14
      %p117 = scmp.lt.s32.totalorder %s14, 3
      %p118 = pnand %p116, %p117
      %p119 = pneg %p118
      // Predicated region
      $region9: #{tpu_custom_call.1} parent=5 // pred_check
        _
      $region10: #{tpu_custom_call.1} parent=5 // pred_check_branch
        %121 = sbr.rel (%p118) target = $region12
      $region11: #{tpu_custom_call.1} parent=5 // pred_region
        %s122 = ssub.s32 %s14, 1
      $region12: #{tpu_custom_call.1} parent=5 // pred_fallthru
        _
      %p123 = scmp.lt.s32.totalorder %s14, 2
      // Predicated region
      $region13: #{tpu_custom_call.1} parent=5 // pred_check
        %p124 = pneg %p123
      $region14: #{tpu_custom_call.1} parent=5 // pred_check_branch
        %126 = sbr.rel (%p124) target = $region16
      $region15: #{tpu_custom_call.1} parent=5 // pred_region
        // Predicated region
        $region17: #{tpu_custom_call.1} parent=15 // pred_check
          %p127 = pneg %p48
        $region18: #{tpu_custom_call.1} parent=15 // pred_check_branch
          %129 = sbr.rel (%p127) target = $region20
        $region19: #{tpu_custom_call.1} parent=15 // pred_region
          %s130 = sand.u32 %s38, 1
          %s131 = scalar_lea.sflag [#allocation3], %s130
          %s132 = sand.u32 %s38, 1
          %s133 = smul.addr %s132, 2
          %s134 = scalar_lea.vmem [#allocation2], %s133
          %s136 = ssub.s32 32, 32
          %137 = vsyncadd %s131, %s136
          %s138 = smul.addr %s22, 2
          %s139 = sadd.s32 %s21, %s138
          %s140 = smul.addr %s139, 32
          %s141 = scalar_lea.hbm %s0, %s140
          %s143 = sshll.u32 %s134, 4
          %s144 = int_to_ptr.vmem [resolvable:$true] %s143
          %146 = dma.hbm_to_vmem [thread:$0]  %s141, 32, %s144, %s131
        $region20: #{tpu_custom_call.1} parent=15 // pred_fallthru
          _
        // Predicated region
        $region21: #{tpu_custom_call.1} parent=15 // pred_check
          %p147 = pneg %p74
        $region22: #{tpu_custom_call.1} parent=15 // pred_check_branch
          %149 = sbr.rel (%p147) target = $region24
        $region23: #{tpu_custom_call.1} parent=15 // pred_region
          %p150 = scmp.lt.s32.totalorder %s21, 1
          %s151 = scalar_select %p150, %s21, 1
          %s152 = scalar_lea.vmem %s1, %s151
        $region24: #{tpu_custom_call.1} parent=15 // pred_fallthru
          _
      $region16: #{tpu_custom_call.1} parent=5 // pred_fallthru
        _
      %p153 = scmp.le.s32.totalorder 1, %s14
      %p154 = scmp.lt.s32.totalorder %s14, 3
      %p155 = pnand %p153, %p154
      %p156 = pneg %p155
      // Predicated region
      $region25: #{tpu_custom_call.1} parent=5 // pred_check
        _
      $region26: #{tpu_custom_call.1} parent=5 // pred_check_branch
        %158 = sbr.rel (%p155) target = $region28
      $region27: #{tpu_custom_call.1} parent=5 // pred_region
        %s159 = ssub.s32 %s14, 1
        %s160 = sand.u32 %s41, 1
        %s161 = scalar_lea.sflag [#allocation3], %s160
        %s162 = sand.u32 %s41, 1
        %s163 = smul.addr %s162, 2
        %s164 = scalar_lea.vmem [#allocation2], %s163
        // Predicated region
        $region29: #{tpu_custom_call.1} parent=27 // pred_check
          %p165 = pneg %p54
        $region30: #{tpu_custom_call.1} parent=27 // pred_check_branch
          %167 = sbr.rel (%p165) target = $region32
        $region31: #{tpu_custom_call.1} parent=27 // pred_region
          %168 = dma.done %s161, 32
        $region32: #{tpu_custom_call.1} parent=27 // pred_fallthru
          _
        %s169 = sand.u32 %s41, 1
        %s170 = scalar_lea.sflag [#allocation3], %s169
        %s171 = sand.u32 %s41, 1
        %s172 = smul.addr %s171, 2
        %s173 = scalar_lea.vmem [#allocation2], %s172
        %p174 = pneg %p54
        %p175 = pneg %p51
        %p176 = scmp.lt.s32.totalorder %s23, 1
        %s177 = scalar_select %p176, %s23, 1
        %s178 = scalar_lea.vmem %s1, %s177
        %p179 = pneg %p80
        %p180 = pneg %p77
        %p181 = pneg %p108
        %p182 = pneg %p105
        %s183 = sand.u32 %s95, 1
        %s184 = scalar_lea.sflag [#allocation4], %s183
        %s185 = sand.u32 %s95, 1
        %s186 = smul.addr %s185, 2
        %s187 = scalar_lea.vmem [#allocation5], %s186
        %p188 = scmp.lt.s32.totalorder %s23, 1
        %s189 = scalar_select %p188, %s23, 1
        %s190 = scalar_lea.vmem %s1, %s189
        %v191 = vld [vmem:[%s164] sm:$0x3]
        %v192 = vld [vmem:[%s190] sm:$0x1]
        %vm193 = vcmp.ne.f32.partialorder %v191, 0.0
        %v195 = vlaneseq
        %v196 = vshrl.u32 %v195, 7
        %v197 = vsub.s32 0, %v196
        %v198 = vrot.slane %v192, %v197
        %v200 = vadd.f32 %v191, %v198
        %v201 = vsel %vm193, %v200, %v191
        %202 = vst [vmem:[%s187] sm:$0x3] %v201
        %s203 = sand.u32 %s95, 1
        %s204 = scalar_lea.sflag [#allocation4], %s203
        %s205 = sand.u32 %s95, 1
        %s206 = smul.addr %s205, 2
        %s207 = scalar_lea.vmem [#allocation5], %s206
        // Predicated region
        $region33: #{tpu_custom_call.1} parent=27 // pred_check
          %p208 = pneg %p105
        $region34: #{tpu_custom_call.1} parent=27 // pred_check_branch
          %210 = sbr.rel (%p208) target = $region36
        $region35: #{tpu_custom_call.1} parent=27 // pred_region
          %s212 = ssub.s32 32, 32
          %213 = vsyncadd %s204, %s212
          %s214 = smul.addr %s24, 2
          %s215 = sadd.s32 %s23, %s214
          %s216 = smul.addr %s215, 32
          %s217 = scalar_lea.hbm %s2, %s216
          %s219 = sshll.u32 %s207, 4
          %s220 = int_to_ptr.vmem [resolvable:$true] %s219
          %222 = dma.vmem_to_hbm [thread:$0]  %s220, 32, %s217, %s204
        $region36: #{tpu_custom_call.1} parent=27 // pred_fallthru
          _
      $region28: #{tpu_custom_call.1} parent=5 // pred_fallthru
        _
      %p223 = scmp.le.s32.totalorder 2, %s14
      // Predicated region
      $region37: #{tpu_custom_call.1} parent=5 // pred_check
        %p224 = pneg %p223
      $region38: #{tpu_custom_call.1} parent=5 // pred_check_branch
        %226 = sbr.rel (%p224) target = $region40
      $region39: #{tpu_custom_call.1} parent=5 // pred_region
        %s227 = ssub.s32 %s14, 2
        // Predicated region
        $region41: #{tpu_custom_call.1} parent=39 // pred_check
          %p228 = pneg %p111
        $region42: #{tpu_custom_call.1} parent=39 // pred_check_branch
          %230 = sbr.rel (%p228) target = $region44
        $region43: #{tpu_custom_call.1} parent=39 // pred_region
          %s231 = sand.u32 %s96, 1
          %s232 = scalar_lea.sflag [#allocation4], %s231
          %s233 = sand.u32 %s96, 1
          %s234 = smul.addr %s233, 2
          %s235 = scalar_lea.vmem [#allocation5], %s234
          %236 = dma.done %s232, 32
        $region44: #{tpu_custom_call.1} parent=39 // pred_fallthru
          _
      $region40: #{tpu_custom_call.1} parent=5 // pred_fallthru
        _
    $region6: #{tpu_custom_call.1} parent=1 // loop_footer
      %s18 = sadd.s32 1, %s14
    $region7: #{tpu_custom_call.1} parent=1 // loop_footer_branch
      %13 = sbr.rel target = $region3
    $region8: #{tpu_custom_call.1} parent=1 // loop_exit
      _
    %237 = vsyncpa [#allocation3], 1
    %s238 = scalar_lea.sflag [#allocation3], 1
    %239 = vsyncpa %s238, 1
    %240 = vsyncpa [#allocation4], 1
    %s241 = scalar_lea.sflag [#allocation4], 1
    %242 = vsyncpa %s241, 1

</llo_original>
